<compile_context>
chip_gen: v5e
topology: v5e:2x2
jax: 0.10.0
libtpu: 0.0.40
codegen_flags: <defaults>
</compile_context>

<pallas_src>
import jax
import jax.numpy as jnp
import numpy as np
from jax.experimental import pallas as pl
from jax.experimental.pallas import tpu as pltpu


def ensemble_kernel(b_ref, q_ref, et_ref, o_ref):
    """One entity tile per grid step (grid axis 0 is 'parallel').

    b_ref : SMEM (1,)      f32  -- Linear(M->1) bias
    q_ref : VMEM (B, K)    bf16 -- queries with w[m] folded in, K = M*D
    et_ref: VMEM (K, tE)   bf16 -- stacked transposed entity tables (one E tile)
    o_ref : VMEM (B, tE)   f32  -- logits tile
    """
    scores = jnp.dot(q_ref[...], et_ref[...], preferred_element_type=jnp.float32)
    o_ref[...] = scores + b_ref[0]


def ensemble_forward(q_bf16, et_bf16, b, *, tile_e=512):
    """q_bf16: (B, K) bf16, et_bf16: (K, E) bf16, b: (1,) f32 -> (B, E, 1) f32."""
    B, K = q_bf16.shape
    K2, E = et_bf16.shape
    assert K == K2

    tE = min(tile_e, E)
    n_tiles = pl.cdiv(E, tE)
    E_pad = n_tiles * tE
    if E_pad != E:
        et_bf16 = jnp.pad(et_bf16, ((0, 0), (0, E_pad - E)))

    out = pl.pallas_call(
        ensemble_kernel,
        out_shape=jax.ShapeDtypeStruct((B, E_pad), jnp.float32),
        grid_spec=pl.GridSpec(
            grid=(n_tiles,),
            in_specs=[
                pl.BlockSpec(memory_space=pltpu.MemorySpace.SMEM),   # bias
                pl.BlockSpec((B, K), lambda e: (0, 0)),              # q (resident)
                pl.BlockSpec((K, tE), lambda e: (0, e)),             # Et tile (streamed)
            ],
            out_specs=pl.BlockSpec((B, tE), lambda e: (0, e)),
        ),
        compiler_params=pltpu.CompilerParams(
            # Entity tiles are independent -> megacore-shardable on v7x.
            dimension_semantics=("parallel",),
            vmem_limit_bytes=64 * 1024 * 1024,
        ),
        cost_estimate=pl.CostEstimate(
            flops=2 * B * K * E_pad,
            transcendentals=0,
            bytes_accessed=2 * B * K + 2 * K * E_pad + 4 * B * E_pad,
        ),
    )(b, q_bf16, et_bf16)

    return out[:, :E].reshape(B, E, 1)


def make_params(key, num_models, num_entities, num_relations, dim):
    """Synthetic ensemble-unit parameters + Linear(M->1) head.

    The stacked, transposed entity table (M*D, E) is built ONCE here (bf16),
    so the forward pass never re-transposes/re-stacks embedding tables.
    """
    keys = jax.random.split(key, 2 * num_models + 2)
    ent_tables = [
        0.1 * jax.random.normal(keys[2 * m], (num_entities, dim), jnp.float32)
        for m in range(num_models)
    ]
    rel_tables = [
        0.1 * jax.random.normal(keys[2 * m + 1], (num_relations, dim), jnp.float32)
        for m in range(num_models)
    ]
    # torch.nn.Linear(M, 1): weight (1, M), bias (1,), uniform(-1/sqrt(M), 1/sqrt(M)).
    bound = 1.0 / np.sqrt(num_models)
    w = jax.random.uniform(keys[-2], (num_models,), jnp.float32, -bound, bound)
    b = jax.random.uniform(keys[-1], (1,), jnp.float32, -bound, bound)
    # Pre-stacked (M*D, E) bf16 entity table for the kernel's RHS.
    et_stacked = jnp.concatenate([e.T for e in ent_tables], axis=0).astype(jnp.bfloat16)
    return ent_tables, rel_tables, et_stacked, w, b


def ensemble_model_apply(batch, ent_tables, rel_tables, et_stacked, w, b, *, tile_e=512):
    """Full EnsembleModel.forward. batch: (B, 2) int32 of (head_idx, rel_idx)."""
    heads = batch[:, 0]
    rels = batch[:, 1]
    num_models = len(ent_tables)
    # Glue: embedding gathers, per-unit elementwise product, and the Linear
    # weight w[m] folded into the query rows (collapses the ensemble axis into
    # the contraction dimension K = M*D).
    q = jnp.concatenate(
        [w[m] * ent_tables[m][heads] * rel_tables[m][rels] for m in range(num_models)],
        axis=-1,
    ).astype(jnp.bfloat16)  # (B, M*D)
    return ensemble_forward(q, et_stacked, b, tile_e=tile_e)  # (B, E, 1)


if __name__ == "__main__":
    num_models = 3        # len(ensemble_units)
    num_entities = 256    # E (tiled by tile_e inside the kernel)
    num_relations = 4
    dim = 128             # D per unit -> K = M*D = 384
    batch_size = 128      # B (>=128 keeps the MXU rows busy per streamed Et tile)
    tile_e = 128          # small tile so the demo exercises >1 grid step

    key = jax.random.PRNGKey(0)
    k_params, k_h, k_r = jax.random.split(key, 3)
    ent_tables, rel_tables, et_stacked, w, b = make_params(
        k_params, num_models, num_entities, num_relations, dim
    )

    heads = jax.random.randint(k_h, (batch_size,), 0, num_entities, jnp.int32)
    rels = jax.random.randint(k_r, (batch_size,), 0, num_relations, jnp.int32)
    batch = jnp.stack([heads, rels], axis=1)  # (B, 2) int32, like batch[:, 0:2] in evaluate()

    logits = ensemble_model_apply(
        batch, ent_tables, rel_tables, et_stacked, w, b, tile_e=tile_e
    )
    logits = jax.block_until_ready(logits)
    assert logits.shape == (batch_size, num_entities, 1)

    # --- Reference 1 (tight): same bf16-cast inputs, f32 accumulation. ---
    q_bf16 = jnp.concatenate(
        [w[m] * ent_tables[m][heads] * rel_tables[m][rels] for m in range(num_models)],
        axis=-1,
    ).astype(jnp.bfloat16)
    ref_bf16 = (
        q_bf16.astype(jnp.float32) @ et_stacked.astype(jnp.float32) + b
    ).reshape(batch_size, num_entities, 1)
    np.testing.assert_allclose(
        np.asarray(logits), np.asarray(ref_bf16), rtol=1e-4, atol=1e-5
    )

    # --- Reference 2 (loose, f32): PyTorch semantics — stack scores, Linear(M->1). ---
    scores_f32 = jnp.stack(
        [
            (ent_tables[m][heads] * rel_tables[m][rels]) @ ent_tables[m].T
            for m in range(num_models)
        ],
        axis=-1,
    )  # (B, E, M)
    ref_f32 = scores_f32 @ w.reshape(num_models, 1) + b  # (B, E, 1)
    np.testing.assert_allclose(
        np.asarray(logits), np.asarray(ref_f32), rtol=2e-2, atol=2e-3
    )

    print("KERNEL_OK")
</pallas_src>

<mosaic_0001>
module attributes {stable_mosaic.version = 11 : i64} {
  func.func @ensemble_kernel(%arg0: i32, %arg1: memref<1xf32, #tpu.memory_space<smem>>, %arg2: memref<128x384xbf16, #tpu.memory_space<vmem>>, %arg3: memref<384x128xbf16, #tpu.memory_space<vmem>>, %arg4: memref<128x128xf32, #tpu.memory_space<vmem>>) attributes {dimension_semantics = [#tpu.dimension_semantics<parallel>], iteration_bounds = array<i64: 2>, scalar_prefetch = 0 : i64, scratch_operands = 0 : i64, tpu.core_type = #tpu.core_type<tc>, window_params = [{transform_indices = @transform_0, window_bounds = array<i64: 1>}, {pipeline_mode = #tpu.pipeline_mode<synchronous>, transform_indices = @transform_1, window_bounds = array<i64: 128, 384>}, {transform_indices = @transform_2, window_bounds = array<i64: 384, 128>}, {transform_indices = @transform_3, window_bounds = array<i64: 128, 128>}]} {
    %c0 = arith.constant 0 : index
    %c0_0 = arith.constant 0 : index
    %0 = vector.load %arg2[%c0, %c0_0] : memref<128x384xbf16, #tpu.memory_space<vmem>>, vector<128x384xbf16>
    %c0_1 = arith.constant 0 : index
    %c0_2 = arith.constant 0 : index
    %1 = vector.load %arg3[%c0_1, %c0_2] : memref<384x128xbf16, #tpu.memory_space<vmem>>, vector<384x128xbf16>
    %cst = arith.constant dense<0.000000e+00> : vector<128x128xf32>
    %2 = tpu.matmul %0, %1, %cst {dimension_numbers = #tpu.dot_dimension_numbers<[1], [0], [0], [1], [0, 0, 1, 1], [], []>} : vector<128x384xbf16>, vector<384x128xbf16>, vector<128x128xf32> -> vector<128x128xf32>
    %c0_3 = arith.constant 0 : index
    %3 = memref.load %arg1[%c0_3] : memref<1xf32, #tpu.memory_space<smem>>
    %4 = vector.broadcast %3 : f32 to vector<128x128xf32>
    %5 = arith.addf %2, %4 : vector<128x128xf32>
    %c0_4 = arith.constant 0 : index
    %c0_5 = arith.constant 0 : index
    %6 = vector.load %arg4[%c0_4, %c0_5] : memref<128x128xf32, #tpu.memory_space<vmem>>, vector<128x128xf32>
    tpu.vector_store %arg4[%c0_4, %c0_5], %5 {strides = array<i32>} : memref<128x128xf32, #tpu.memory_space<vmem>>, vector<128x128xf32>,
    return
  }
  func.func @transform_0(%arg0: i32) -> i32 {
    %c0_i32 = arith.constant 0 : i32
    %c0_i32_0 = arith.constant 0 : i32
    return %c0_i32 : i32
  }
  func.func @transform_1(%arg0: i32) -> (i32, i32) {
    %c0_i32 = arith.constant 0 : i32
    %c0_i32_0 = arith.constant 0 : i32
    %c0_i32_1 = arith.constant 0 : i32
    return %c0_i32, %c0_i32_0 : i32, i32
  }
  func.func @transform_2(%arg0: i32) -> (i32, i32) {
    %c0_i32 = arith.constant 0 : i32
    %c0_i32_0 = arith.constant 0 : i32
    return %c0_i32, %arg0 : i32, i32
  }
  func.func @transform_3(%arg0: i32) -> (i32, i32) {
    %c0_i32 = arith.constant 0 : i32
    %c0_i32_0 = arith.constant 0 : i32
    return %c0_i32, %arg0 : i32, i32
  }
}

</mosaic_0001>

<llo_original>
// kernel: tpu_custom_call.1
$region0: #{tpu_custom_call.1}
  #allocation0 [shape = 'u32[]', space=smem, size = 0x4, offset = 0x4, fixed_abs, tag = 'smem constant byte address 0x4 - core index']
  #allocation1 [shape = 'u32[72,128]{1,0:T(1,128)}', space=vmem, size = 0x9000, scoped, tag = 'internal scratch']
  #allocation2 [shape = 'f32[1]{0:T(128)S(6)}', space=smem, size = 0x200, scoped, tag = 'scoped memory for tpu_custom_call.1']
  %s0 = inlined_call_operand.<no memory space> [shape: f32[1], index: 0, kind: input, shape index: {}]
  %s1 = inlined_call_operand.hbm [shape: bf16[128,384], index: 1, kind: input, shape index: {}]
  %s2 = inlined_call_operand.hbm [shape: bf16[384,256], index: 2, kind: input, shape index: {}]
  %s3 = inlined_call_operand.hbm [shape: f32[128,256], index: 3, kind: output, shape index: {}]
  %s4 = sld [smem:[#allocation0]]
  $region53: #{tpu_custom_call.1} parent=0
    _
  %s6 = ssub.s32 1, %s4
  %s7 = scalar_select 0, %s6, %s4
  %8 = sst [smem:[#allocation2]] %s0
  $region1: #{tpu_custom_call.1} parent=0
    #allocation3 [shape = 'u8[98304]{0}', space=vmem, size = 0x18000, scoped, tag = 'input window, operand 1, single buffered']
    #allocation4 [shape = 's32[2]{0}', space=sflag, size = 0x8, scoped, tag = 'scoped memory for tpu_custom_call.1']
    #allocation5 [shape = 's32[2]{0}', space=sflag, size = 0x8, scoped, tag = 'scoped memory for tpu_custom_call.1']
    #allocation6 [shape = 'u8[196608]{0}', space=vmem, size = 0x30000, scoped, tag = 'input window, operand 2']
    #allocation7 [shape = 's32[2]{0}', space=sflag, size = 0x8, scoped, tag = 'scoped memory for tpu_custom_call.1']
    #allocation8 [shape = 'u8[131072]{0}', space=vmem, size = 0x20000, scoped, tag = 'output window, operand 0']
    %9 = vsyncpa [#allocation4], 0
    %10 = vsyncpa [#allocation7], 0
    %s11 = scalar_lea.sflag [#allocation7], 1
    %12 = vsyncpa %s11, 0
    %13 = vsyncpa [#allocation5], 0
    %s14 = scalar_lea.sflag [#allocation5], 1
    %15 = vsyncpa %s14, 0
    loop: start=0, step=1, limit=4
    $region2: #{tpu_custom_call.1} parent=1 // loop_pre_header
      _
    $region3: #{tpu_custom_call.1} parent=1 // loop_header
      %s17 = sphi 0, %s21
      %p18 = scmp.ge.s32.totalorder %s17, 4
      %s25 = sphi 0, %s25
      %s27 = sphi 0, %s25
      %s28 = sphi 0, %s27
      %s42 = sphi 0, %s28
      %s46 = sphi 0, %s46
      %s48 = sphi 0, %s46
      %s49 = sphi 0, %s48
      %s63 = sphi 0, %s49
      %s69 = sphi 0, %s71
      %s72 = sphi 0, %s69
      %s73 = sphi 0, %s72
      %s89 = sphi 0, %s73
      %s95 = sphi 0, %s97
      %s98 = sphi 0, %s95
      %s99 = sphi 0, %s98
      %s115 = sphi 0, %s99
    $region4: #{tpu_custom_call.1} parent=1 // loop_header_branch
      %20 = sbr.rel (%p18) target = $region8
    $region5: #{tpu_custom_call.1} parent=1 // loop_body
      %s22 = ssub.s32 %s17, 1
      %s23 = ssub.s32 %s17, 2
      %s24 = sadd.s32 %s17, 1
      %s26 = sadd.s32 %s25, 1
      %p29 = scmp.eq.s32.totalorder %s17, 1
      %p30 = scmp.ne.s32.totalorder %s25, %s27
      %p31 = scmp.eq.s32.totalorder %s17, 0
      %p32 = por %p30, %p31
      %p33 = scmp.ne.s32.totalorder %s25, %s27
      %p34 = scmp.eq.s32.totalorder %s22, 1
      %p35 = por %p33, %p34
      %p36 = scmp.ne.s32.totalorder %s27, %s28
      %p37 = scmp.eq.s32.totalorder %s22, 0
      %p38 = por %p36, %p37
      %p39 = scmp.ne.s32.totalorder %s27, %s28
      %p40 = scmp.eq.s32.totalorder %s23, 1
      %p41 = por %p39, %p40
      %p43 = scmp.ne.s32.totalorder %s28, %s42
      %p44 = scmp.eq.s32.totalorder %s23, 0
      %p45 = por %p43, %p44
      %s47 = sadd.s32 %s46, 1
      %p50 = scmp.eq.s32.totalorder %s17, 1
      %p51 = scmp.ne.s32.totalorder %s46, %s48
      %p52 = scmp.eq.s32.totalorder %s17, 0
      %p53 = por %p51, %p52
      %p54 = scmp.ne.s32.totalorder %s46, %s48
      %p55 = scmp.eq.s32.totalorder %s22, 1
      %p56 = por %p54, %p55
      %p57 = scmp.ne.s32.totalorder %s48, %s49
      %p58 = scmp.eq.s32.totalorder %s22, 0
      %p59 = por %p57, %p58
      %p60 = scmp.ne.s32.totalorder %s48, %s49
      %p61 = scmp.eq.s32.totalorder %s23, 1
      %p62 = por %p60, %p61
      %p64 = scmp.ne.s32.totalorder %s49, %s63
      %p65 = scmp.eq.s32.totalorder %s23, 0
      %p66 = por %p64, %p65
      %s67 = ssub.s32 %s17, %s24
      %p68 = scmp.eq.s32.totalorder %s67, 0
      %s70 = sadd.s32 %s69, 1
      %s71 = scalar_select %p68, %s69, %s70
      %p74 = pneg %p68
      %p75 = scmp.eq.s32.totalorder %s17, 1
      %p76 = por %p74, %p75
      %p77 = scmp.ne.s32.totalorder %s69, %s72
      %p78 = scmp.eq.s32.totalorder %s17, 0
      %p79 = por %p77, %p78
      %p80 = scmp.ne.s32.totalorder %s69, %s72
      %p81 = scmp.eq.s32.totalorder %s22, 1
      %p82 = por %p80, %p81
      %p83 = scmp.ne.s32.totalorder %s72, %s73
      %p84 = scmp.eq.s32.totalorder %s22, 0
      %p85 = por %p83, %p84
      %p86 = scmp.ne.s32.totalorder %s72, %s73
      %p87 = scmp.eq.s32.totalorder %s23, 1
      %p88 = por %p86, %p87
      %p90 = scmp.ne.s32.totalorder %s73, %s89
      %p91 = scmp.eq.s32.totalorder %s23, 0
      %p92 = por %p90, %p91
      %s93 = ssub.s32 %s17, %s24
      %p94 = scmp.eq.s32.totalorder %s93, 0
      %s96 = sadd.s32 %s95, 1
      %s97 = scalar_select %p94, %s95, %s96
      %p100 = pneg %p94
      %p101 = scmp.eq.s32.totalorder %s17, 1
      %p102 = por %p100, %p101
      %p103 = scmp.ne.s32.totalorder %s95, %s98
      %p104 = scmp.eq.s32.totalorder %s17, 0
      %p105 = por %p103, %p104
      %p106 = scmp.ne.s32.totalorder %s95, %s98
      %p107 = scmp.eq.s32.totalorder %s22, 1
      %p108 = por %p106, %p107
      %p109 = scmp.ne.s32.totalorder %s98, %s99
      %p110 = scmp.eq.s32.totalorder %s22, 0
      %p111 = por %p109, %p110
      %p112 = scmp.ne.s32.totalorder %s98, %s99
      %p113 = scmp.eq.s32.totalorder %s23, 1
      %p114 = por %p112, %p113
      %p116 = scmp.ne.s32.totalorder %s99, %s115
      %p117 = scmp.eq.s32.totalorder %s23, 0
      %p118 = por %p116, %p117
      %p119 = scmp.le.s32.totalorder 1, %s17
      %p120 = scmp.lt.s32.totalorder %s17, 3
      %p121 = pnand %p119, %p120
      %p122 = pneg %p121
      // Predicated region
      $region9: #{tpu_custom_call.1} parent=5 // pred_check
        _
      $region10: #{tpu_custom_call.1} parent=5 // pred_check_branch
        %124 = sbr.rel (%p121) target = $region12
      $region11: #{tpu_custom_call.1} parent=5 // pred_region
        %s125 = ssub.s32 %s17, 1
        // Predicated region
        $region13: #{tpu_custom_call.1} parent=11 // pred_check
          %p126 = pneg %p38
        $region14: #{tpu_custom_call.1} parent=11 // pred_check_branch
          %128 = sbr.rel (%p126) target = $region16
        $region15: #{tpu_custom_call.1} parent=11 // pred_region
          _
        $region16: #{tpu_custom_call.1} parent=11 // pred_fallthru
          _
        // Predicated region
        $region17: #{tpu_custom_call.1} parent=11 // pred_check
          %p129 = pneg %p59
        $region18: #{tpu_custom_call.1} parent=11 // pred_check_branch
          %131 = sbr.rel (%p129) target = $region20
        $region19: #{tpu_custom_call.1} parent=11 // pred_region
          %133 = vsyncadd [#allocation4], 0
          %s134 = sshll.u32 %s1, 4
          %s135 = int_to_ptr.hbm [resolvable:$true] %s134
          %s136 = sshll.u32 [#allocation3], 4
          %s137 = int_to_ptr.vmem [resolvable:$true] %s136
          %142 = dma.hbm_to_vmem [thread:$0]  %s135, 3072, %s137, [#allocation4], 192, 192, 12
        $region20: #{tpu_custom_call.1} parent=11 // pred_fallthru
          _
      $region12: #{tpu_custom_call.1} parent=5 // pred_fallthru
        _
      %p143 = scmp.lt.s32.totalorder %s17, 2
      // Predicated region
      $region21: #{tpu_custom_call.1} parent=5 // pred_check
        %p144 = pneg %p143
      $region22: #{tpu_custom_call.1} parent=5 // pred_check_branch
        %146 = sbr.rel (%p144) target = $region24
      $region23: #{tpu_custom_call.1} parent=5 // pred_region
        // Predicated region
        $region25: #{tpu_custom_call.1} parent=23 // pred_check
          %p147 = pneg %p79
        $region26: #{tpu_custom_call.1} parent=23 // pred_check_branch
          %149 = sbr.rel (%p147) target = $region28
        $region27: #{tpu_custom_call.1} parent=23 // pred_region
          %s150 = sand.u32 %s69, 1
          %s151 = scalar_lea.sflag [#allocation7], %s150
          %s152 = sand.u32 %s69, 1
          %s153 = smul.addr %s152, 192
          %s154 = scalar_lea.vmem [#allocation6], %s153
          %156 = vsyncadd %s151, 0
          %s157 = smul.addr %s17, 4
          %s158 = scalar_lea.hbm %s2, %s157
          %s159 = sshll.u32 %s158, 4
          %s160 = int_to_ptr.hbm [resolvable:$true] %s159
          %s161 = sshll.u32 %s154, 4
          %s162 = int_to_ptr.vmem [resolvable:$true] %s161
          %167 = dma.hbm_to_vmem [thread:$0]  %s160, 3072, %s162, %s151, 128, 64, 4
        $region28: #{tpu_custom_call.1} parent=23 // pred_fallthru
          _
      $region24: #{tpu_custom_call.1} parent=5 // pred_fallthru
        _
      %p168 = scmp.le.s32.totalorder 1, %s17
      %p169 = scmp.lt.s32.totalorder %s17, 3
      %p170 = pnand %p168, %p169
      %p171 = pneg %p170
      // Predicated region
      $region29: #{tpu_custom_call.1} parent=5 // pred_check
        _
      $region30: #{tpu_custom_call.1} parent=5 // pred_check_branch
        %173 = sbr.rel (%p170) target = $region32
      $region31: #{tpu_custom_call.1} parent=5 // pred_region
        %s174 = ssub.s32 %s17, 1
        // Predicated region
        $region33: #{tpu_custom_call.1} parent=31 // pred_check
          %p175 = pneg %p59
        $region34: #{tpu_custom_call.1} parent=31 // pred_check_branch
          %177 = sbr.rel (%p175) target = $region36
        $region35: #{tpu_custom_call.1} parent=31 // pred_region
          %179 = dma.done [#allocation4], 3072
        $region36: #{tpu_custom_call.1} parent=31 // pred_fallthru
          _
        %s180 = sand.u32 %s72, 1
        %s181 = scalar_lea.sflag [#allocation7], %s180
        %s182 = sand.u32 %s72, 1
        %s183 = smul.addr %s182, 192
        %s184 = scalar_lea.vmem [#allocation6], %s183
        // Predicated region
        $region37: #{tpu_custom_call.1} parent=31 // pred_check
          %p185 = pneg %p85
        $region38: #{tpu_custom_call.1} parent=31 // pred_check_branch
          %187 = sbr.rel (%p185) target = $region40
        $region39: #{tpu_custom_call.1} parent=31 // pred_region
          %189 = dma.done %s181, 3072
        $region40: #{tpu_custom_call.1} parent=31 // pred_fallthru
          _
        %p190 = pneg %p38
        %p191 = pneg %p35
        %p192 = pneg %p59
        %p193 = pneg %p56
        %s194 = sand.u32 %s72, 1
        %s195 = scalar_lea.sflag [#allocation7], %s194
        %s196 = sand.u32 %s72, 1
        %s197 = smul.addr %s196, 192
        %s198 = scalar_lea.vmem [#allocation6], %s197
        %p199 = pneg %p85
        %p200 = pneg %p82
        %p201 = pneg %p111
        %p202 = pneg %p108
        %s203 = sand.u32 %s98, 1
        %s204 = scalar_lea.sflag [#allocation5], %s203
        %s205 = sand.u32 %s98, 1
        %s206 = smul.addr %s205, 128
        %s207 = scalar_lea.vmem [#allocation8], %s206
        %v208 = vld [vmem:[#allocation3] sm:$0xff]
        %v209 = vld [vmem:[#allocation3 + $0x8] sm:$0xf]
        %v210 = vld [vmem:[#allocation3 + $0xc] sm:$0xff]
        %v211 = vld [vmem:[#allocation3 + $0x14] sm:$0xf]
        %v212 = vld [vmem:[#allocation3 + $0x18] sm:$0xff]
        %v213 = vld [vmem:[#allocation3 + $0x20] sm:$0xf]
        %v214 = vld [vmem:[#allocation3 + $0x24] sm:$0xff]
        %v215 = vld [vmem:[#allocation3 + $0x2c] sm:$0xf]
        %v216 = vld [vmem:[#allocation3 + $0x30] sm:$0xff]
        %v217 = vld [vmem:[#allocation3 + $0x38] sm:$0xf]
        %v218 = vld [vmem:[#allocation3 + $0x3c] sm:$0xff]
        %v219 = vld [vmem:[#allocation3 + $0x44] sm:$0xf]
        %v220 = vld [vmem:[#allocation3 + $0x48] sm:$0xff]
        %v221 = vld [vmem:[#allocation3 + $0x50] sm:$0xf]
        %v222 = vld [vmem:[#allocation3 + $0x54] sm:$0xff]
        %v223 = vld [vmem:[#allocation3 + $0x5c] sm:$0xf]
        %v224 = vld [vmem:[#allocation3 + $0x60] sm:$0xff]
        %v225 = vld [vmem:[#allocation3 + $0x68] sm:$0xf]
        %v226 = vld [vmem:[#allocation3 + $0x6c] sm:$0xff]
        %v227 = vld [vmem:[#allocation3 + $0x74] sm:$0xf]
        %v228 = vld [vmem:[#allocation3 + $0x78] sm:$0xff]
        %v229 = vld [vmem:[#allocation3 + $0x80] sm:$0xf]
        %v230 = vld [vmem:[#allocation3 + $0x84] sm:$0xff]
        %v231 = vld [vmem:[#allocation3 + $0x8c] sm:$0xf]
        %v232 = vld [vmem:[#allocation3 + $0x90] sm:$0xff]
        %v233 = vld [vmem:[#allocation3 + $0x98] sm:$0xf]
        %v234 = vld [vmem:[#allocation3 + $0x9c] sm:$0xff]
        %v235 = vld [vmem:[#allocation3 + $0xa4] sm:$0xf]
        %v236 = vld [vmem:[#allocation3 + $0xa8] sm:$0xff]
        %v237 = vld [vmem:[#allocation3 + $0xb0] sm:$0xf]
        %v238 = vld [vmem:[#allocation3 + $0xb4] sm:$0xff]
        %v239 = vld [vmem:[#allocation3 + $0xbc] sm:$0xf]
        %v240 = vld [vmem:[%s184] sm:$0xf]
        %v241 = vld [vmem:[%s184 + $0x4] sm:$0xf]
        %v242 = vld [vmem:[%s184 + $0x8] sm:$0xf]
        %v243 = vld [vmem:[%s184 + $0xc] sm:$0xf]
        %v244 = vld [vmem:[%s184 + $0x10] sm:$0xf]
        %v245 = vld [vmem:[%s184 + $0x14] sm:$0xf]
        %v246 = vld [vmem:[%s184 + $0x18] sm:$0xf]
        %v247 = vld [vmem:[%s184 + $0x1c] sm:$0xf]
        %v248 = vld [vmem:[%s184 + $0x20] sm:$0xf]
        %v249 = vld [vmem:[%s184 + $0x24] sm:$0xf]
        %v250 = vld [vmem:[%s184 + $0x28] sm:$0xf]
        %v251 = vld [vmem:[%s184 + $0x2c] sm:$0xf]
        %v252 = vld [vmem:[%s184 + $0x30] sm:$0xf]
        %v253 = vld [vmem:[%s184 + $0x34] sm:$0xf]
        %v254 = vld [vmem:[%s184 + $0x38] sm:$0xf]
        %v255 = vld [vmem:[%s184 + $0x3c] sm:$0xf]
        %v256 = vld [vmem:[%s184 + $0x40] sm:$0xf]
        %v257 = vld [vmem:[%s184 + $0x44] sm:$0xf]
        %v258 = vld [vmem:[%s184 + $0x48] sm:$0xf]
        %v259 = vld [vmem:[%s184 + $0x4c] sm:$0xf]
        %v260 = vld [vmem:[%s184 + $0x50] sm:$0xf]
        %v261 = vld [vmem:[%s184 + $0x54] sm:$0xf]
        %v262 = vld [vmem:[%s184 + $0x58] sm:$0xf]
        %v263 = vld [vmem:[%s184 + $0x5c] sm:$0xf]
        %v264 = vld [vmem:[%s184 + $0x60] sm:$0xf]
        %v265 = vld [vmem:[%s184 + $0x64] sm:$0xf]
        %v266 = vld [vmem:[%s184 + $0x68] sm:$0xf]
        %v267 = vld [vmem:[%s184 + $0x6c] sm:$0xf]
        %v268 = vld [vmem:[%s184 + $0x70] sm:$0xf]
        %v269 = vld [vmem:[%s184 + $0x74] sm:$0xf]
        %v270 = vld [vmem:[%s184 + $0x78] sm:$0xf]
        %v271 = vld [vmem:[%s184 + $0x7c] sm:$0xf]
        %v272 = vld [vmem:[%s184 + $0x80] sm:$0xf]
        %v273 = vld [vmem:[%s184 + $0x84] sm:$0xf]
        %v274 = vld [vmem:[%s184 + $0x88] sm:$0xf]
        %v275 = vld [vmem:[%s184 + $0x8c] sm:$0xf]
        %v276 = vld [vmem:[%s184 + $0x90] sm:$0xf]
        %v277 = vld [vmem:[%s184 + $0x94] sm:$0xf]
        %v278 = vld [vmem:[%s184 + $0x98] sm:$0xf]
        %v279 = vld [vmem:[%s184 + $0x9c] sm:$0xf]
        %v280 = vld [vmem:[%s184 + $0xa0] sm:$0xf]
        %v281 = vld [vmem:[%s184 + $0xa4] sm:$0xf]
        %v282 = vld [vmem:[%s184 + $0xa8] sm:$0xf]
        %v283 = vld [vmem:[%s184 + $0xac] sm:$0xf]
        %v284 = vld [vmem:[%s184 + $0xb0] sm:$0xf]
        %v285 = vld [vmem:[%s184 + $0xb4] sm:$0xf]
        %v286 = vld [vmem:[%s184 + $0xb8] sm:$0xf]
        %v287 = vld [vmem:[%s184 + $0xbc] sm:$0xf]
        %s288 = sld [smem:[#allocation2]]
        %v289 = vstv %s288
        %v322 = vunpack.c.l.b16 %v208
        %v323 = vunpack.c.h.b16 %v208
        %v324 = vunpack.c.l.b16 %v209
        %v325 = vunpack.c.l.b16 %v210
        %v326 = vunpack.c.h.b16 %v210
        %v327 = vunpack.c.l.b16 %v211
        %v328 = vunpack.c.l.b16 %v212
        %v329 = vunpack.c.h.b16 %v212
        %v330 = vunpack.c.l.b16 %v213
        %v331 = vunpack.c.l.b16 %v214
        %v332 = vunpack.c.h.b16 %v214
        %v333 = vunpack.c.l.b16 %v215
        %v334 = vunpack.c.l.b16 %v216
        %v335 = vunpack.c.h.b16 %v216
        %v336 = vunpack.c.l.b16 %v217
        %v337 = vunpack.c.l.b16 %v218
        %v338 = vunpack.c.h.b16 %v218
        %v339 = vunpack.c.l.b16 %v219
        %v340 = vunpack.c.l.b16 %v220
        %v341 = vunpack.c.h.b16 %v220
        %v342 = vunpack.c.l.b16 %v221
        %v343 = vunpack.c.l.b16 %v222
        %v344 = vunpack.c.h.b16 %v222
        %v345 = vunpack.c.l.b16 %v223
        %v346 = vunpack.c.l.b16 %v224
        %v347 = vunpack.c.h.b16 %v224
        %v348 = vunpack.c.l.b16 %v225
        %v349 = vunpack.c.l.b16 %v226
        %v350 = vunpack.c.h.b16 %v226
        %v351 = vunpack.c.l.b16 %v227
        %v352 = vunpack.c.l.b16 %v228
        %v353 = vunpack.c.h.b16 %v228
        %v354 = vunpack.c.l.b16 %v229
        %v355 = vunpack.c.l.b16 %v230
        %v356 = vunpack.c.h.b16 %v230
        %v357 = vunpack.c.l.b16 %v231
        %v358 = vunpack.c.l.b16 %v232
        %v359 = vunpack.c.h.b16 %v232
        %v360 = vunpack.c.l.b16 %v233
        %v361 = vunpack.c.l.b16 %v234
        %v362 = vunpack.c.h.b16 %v234
        %v363 = vunpack.c.l.b16 %v235
        %v364 = vunpack.c.l.b16 %v236
        %v365 = vunpack.c.h.b16 %v236
        %v366 = vunpack.c.l.b16 %v237
        %v367 = vunpack.c.l.b16 %v238
        %v368 = vunpack.c.h.b16 %v238
        %v369 = vunpack.c.l.b16 %v239
        %v370 = vpack.c.b16 %v325, %v322
        %v371 = vpack.c.b16 %v326, %v323
        %v372 = vpack.c.b16 %v327, %v324
        %v373 = vpack.c.b16 %v331, %v328
        %v374 = vpack.c.b16 %v332, %v329
        %v375 = vpack.c.b16 %v333, %v330
        %v376 = vpack.c.b16 %v337, %v334
        %v377 = vpack.c.b16 %v338, %v335
        %v378 = vpack.c.b16 %v339, %v336
        %v379 = vpack.c.b16 %v343, %v340
        %v380 = vpack.c.b16 %v344, %v341
        %v381 = vpack.c.b16 %v345, %v342
        %v382 = vpack.c.b16 %v349, %v346
        %v383 = vpack.c.b16 %v350, %v347
        %v384 = vpack.c.b16 %v351, %v348
        %v385 = vpack.c.b16 %v355, %v352
        %v386 = vpack.c.b16 %v356, %v353
        %v387 = vpack.c.b16 %v357, %v354
        %v388 = vpack.c.b16 %v361, %v358
        %v389 = vpack.c.b16 %v362, %v359
        %v390 = vpack.c.b16 %v363, %v360
        %v391 = vpack.c.b16 %v367, %v364
        %v392 = vpack.c.b16 %v368, %v365
        %v393 = vpack.c.b16 %v369, %v366
        %v466 = vunpack.c.l.b16 %v240
        %v467 = vunpack.c.l.b16 %v241
        %v468 = vunpack.c.l.b16 %v242
        %v469 = vunpack.c.l.b16 %v243
        %v470 = vunpack.c.l.b16 %v244
        %v471 = vunpack.c.l.b16 %v245
        %v472 = vunpack.c.l.b16 %v246
        %v473 = vunpack.c.l.b16 %v247
        %v474 = vunpack.c.l.b16 %v248
        %v475 = vunpack.c.l.b16 %v249
        %v476 = vunpack.c.l.b16 %v250
        %v477 = vunpack.c.l.b16 %v251
        %v478 = vunpack.c.l.b16 %v252
        %v479 = vunpack.c.l.b16 %v253
        %v480 = vunpack.c.l.b16 %v254
        %v481 = vunpack.c.l.b16 %v255
        %v482 = vunpack.c.l.b16 %v256
        %v483 = vunpack.c.l.b16 %v257
        %v484 = vunpack.c.l.b16 %v258
        %v485 = vunpack.c.l.b16 %v259
        %v486 = vunpack.c.l.b16 %v260
        %v487 = vunpack.c.l.b16 %v261
        %v488 = vunpack.c.l.b16 %v262
        %v489 = vunpack.c.l.b16 %v263
        %v490 = vunpack.c.l.b16 %v264
        %v491 = vunpack.c.l.b16 %v265
        %v492 = vunpack.c.l.b16 %v266
        %v493 = vunpack.c.l.b16 %v267
        %v494 = vunpack.c.l.b16 %v268
        %v495 = vunpack.c.l.b16 %v269
        %v496 = vunpack.c.l.b16 %v270
        %v497 = vunpack.c.l.b16 %v271
        %v498 = vunpack.c.l.b16 %v272
        %v499 = vunpack.c.l.b16 %v273
        %v500 = vunpack.c.l.b16 %v274
        %v501 = vunpack.c.l.b16 %v275
        %v502 = vunpack.c.l.b16 %v276
        %v503 = vunpack.c.l.b16 %v277
        %v504 = vunpack.c.l.b16 %v278
        %v505 = vunpack.c.l.b16 %v279
        %v506 = vunpack.c.l.b16 %v280
        %v507 = vunpack.c.l.b16 %v281
        %v508 = vunpack.c.l.b16 %v282
        %v509 = vunpack.c.l.b16 %v283
        %v510 = vunpack.c.l.b16 %v284
        %v511 = vunpack.c.l.b16 %v285
        %v512 = vunpack.c.l.b16 %v286
        %v513 = vunpack.c.l.b16 %v287
        %v514 = vpack.c.b16 %v467, %v466
        %v515 = vpack.c.b16 %v469, %v468
        %v516 = vpack.c.b16 %v471, %v470
        %v517 = vpack.c.b16 %v473, %v472
        %v518 = vpack.c.b16 %v475, %v474
        %v519 = vpack.c.b16 %v477, %v476
        %v520 = vpack.c.b16 %v479, %v478
        %v521 = vpack.c.b16 %v481, %v480
        %v522 = vpack.c.b16 %v483, %v482
        %v523 = vpack.c.b16 %v485, %v484
        %v524 = vpack.c.b16 %v487, %v486
        %v525 = vpack.c.b16 %v489, %v488
        %v526 = vpack.c.b16 %v491, %v490
        %v527 = vpack.c.b16 %v493, %v492
        %v528 = vpack.c.b16 %v495, %v494
        %v529 = vpack.c.b16 %v497, %v496
        %v530 = vpack.c.b16 %v499, %v498
        %v531 = vpack.c.b16 %v501, %v500
        %v532 = vpack.c.b16 %v503, %v502
        %v533 = vpack.c.b16 %v505, %v504
        %v534 = vpack.c.b16 %v507, %v506
        %v535 = vpack.c.b16 %v509, %v508
        %v536 = vpack.c.b16 %v511, %v510
        %v537 = vpack.c.b16 %v513, %v512
        %562 = vmatpush.bf16.msra.mxu0 %v521
        %563 = vmatpush.bf16.msra.mxu0 %v520
        %564 = vmatpush.bf16.msra.mxu0 %v519
        %565 = vmatpush.bf16.msra.mxu0 %v518
        %566 = vmatpush.bf16.msra.mxu0 %v517
        %567 = vmatpush.bf16.msra.mxu0 %v516
        %568 = vmatpush.bf16.msra.mxu0 %v515
        %569 = vmatpush.bf16.msra.mxu0 %v514
        %570 = vmatmul.bf16.gmra.mxu0 %v370
        %v571 = vpop.f32.mrf.mxu0
        %v572 = vadd.f32 %v289, %v571
        %v573 = vpop.f32.mrf.mxu0
        %v574 = vadd.f32 %v289, %v573
        %575 = vmatmul.bf16.gmra.mxu0 %v373
        %v576 = vpop.f32.mrf.mxu0
        %v577 = vadd.f32 %v289, %v576
        %v578 = vpop.f32.mrf.mxu0
        %v579 = vadd.f32 %v289, %v578
        %580 = vmatmul.bf16.gmra.mxu0 %v376
        %v581 = vpop.f32.mrf.mxu0
        %v582 = vadd.f32 %v289, %v581
        %v583 = vpop.f32.mrf.mxu0
        %v584 = vadd.f32 %v289, %v583
        %585 = vmatmul.bf16.gmra.mxu0 %v379
        %v586 = vpop.f32.mrf.mxu0
        %v587 = vadd.f32 %v289, %v586
        %v588 = vpop.f32.mrf.mxu0
        %v589 = vadd.f32 %v289, %v588
        %590 = vmatmul.bf16.gmra.mxu0 %v382
        %v591 = vpop.f32.mrf.mxu0
        %v592 = vadd.f32 %v289, %v591
        %v593 = vpop.f32.mrf.mxu0
        %v594 = vadd.f32 %v289, %v593
        %595 = vmatmul.bf16.gmra.mxu0 %v385
        %v596 = vpop.f32.mrf.mxu0
        %v597 = vadd.f32 %v289, %v596
        %v598 = vpop.f32.mrf.mxu0
        %v599 = vadd.f32 %v289, %v598
        %600 = vmatmul.bf16.gmra.mxu0 %v388
        %v601 = vpop.f32.mrf.mxu0
        %v602 = vadd.f32 %v289, %v601
        %v603 = vpop.f32.mrf.mxu0
        %v604 = vadd.f32 %v289, %v603
        %605 = vmatmul.bf16.gmra.mxu0 %v391
        %v606 = vpop.f32.mrf.mxu0
        %v607 = vadd.f32 %v289, %v606
        %v608 = vpop.f32.mrf.mxu0
        %v609 = vadd.f32 %v289, %v608
        %610 = vdwg.mxu0
        %611 = vmatpush.bf16.msra.mxu0 %v529
        %612 = vmatpush.bf16.msra.mxu0 %v528
        %613 = vmatpush.bf16.msra.mxu0 %v527
        %614 = vmatpush.bf16.msra.mxu0 %v526
        %615 = vmatpush.bf16.msra.mxu0 %v525
        %616 = vmatpush.bf16.msra.mxu0 %v524
        %617 = vmatpush.bf16.msra.mxu0 %v523
        %618 = vmatpush.bf16.msra.mxu0 %v522
        %619 = vmatmul.bf16.gmra.mxu0 %v371
        %v620 = vpop.f32.mrf.mxu0
        %v621 = vadd.f32 %v572, %v620
        %v622 = vpop.f32.mrf.mxu0
        %v623 = vadd.f32 %v574, %v622
        %624 = vmatmul.bf16.gmra.mxu0 %v374
        %v625 = vpop.f32.mrf.mxu0
        %v626 = vadd.f32 %v577, %v625
        %v627 = vpop.f32.mrf.mxu0
        %v628 = vadd.f32 %v579, %v627
        %629 = vmatmul.bf16.gmra.mxu0 %v377
        %v630 = vpop.f32.mrf.mxu0
        %v631 = vadd.f32 %v582, %v630
        %v632 = vpop.f32.mrf.mxu0
        %v633 = vadd.f32 %v584, %v632
        %634 = vmatmul.bf16.gmra.mxu0 %v380
        %v635 = vpop.f32.mrf.mxu0
        %v636 = vadd.f32 %v587, %v635
        %v637 = vpop.f32.mrf.mxu0
        %v638 = vadd.f32 %v589, %v637
        %639 = vmatmul.bf16.gmra.mxu0 %v383
        %v640 = vpop.f32.mrf.mxu0
        %v641 = vadd.f32 %v592, %v640
        %v642 = vpop.f32.mrf.mxu0
        %v643 = vadd.f32 %v594, %v642
        %644 = vmatmul.bf16.gmra.mxu0 %v386
        %v645 = vpop.f32.mrf.mxu0
        %v646 = vadd.f32 %v597, %v645
        %v647 = vpop.f32.mrf.mxu0
        %v648 = vadd.f32 %v599, %v647
        %649 = vmatmul.bf16.gmra.mxu0 %v389
        %v650 = vpop.f32.mrf.mxu0
        %v651 = vadd.f32 %v602, %v650
        %v652 = vpop.f32.mrf.mxu0
        %v653 = vadd.f32 %v604, %v652
        %654 = vmatmul.bf16.gmra.mxu0 %v392
        %v655 = vpop.f32.mrf.mxu0
        %v656 = vadd.f32 %v607, %v655
        %v657 = vpop.f32.mrf.mxu0
        %v658 = vadd.f32 %v609, %v657
        %659 = vdwg.mxu0
        %660 = vmatpush.bf16.msra.mxu0 %v537
        %661 = vmatpush.bf16.msra.mxu0 %v536
        %662 = vmatpush.bf16.msra.mxu0 %v535
        %663 = vmatpush.bf16.msra.mxu0 %v534
        %664 = vmatpush.bf16.msra.mxu0 %v533
        %665 = vmatpush.bf16.msra.mxu0 %v532
        %666 = vmatpush.bf16.msra.mxu0 %v531
        %667 = vmatpush.bf16.msra.mxu0 %v530
        %668 = vmatmul.bf16.gmra.mxu0 %v372
        %v669 = vpop.f32.mrf.mxu0
        %v670 = vadd.f32 %v621, %v669
        %v671 = vpop.f32.mrf.mxu0
        %v672 = vadd.f32 %v623, %v671
        %673 = vmatmul.bf16.gmra.mxu0 %v375
        %v674 = vpop.f32.mrf.mxu0
        %v675 = vadd.f32 %v626, %v674
        %v676 = vpop.f32.mrf.mxu0
        %v677 = vadd.f32 %v628, %v676
        %678 = vmatmul.bf16.gmra.mxu0 %v378
        %v679 = vpop.f32.mrf.mxu0
        %v680 = vadd.f32 %v631, %v679
        %v681 = vpop.f32.mrf.mxu0
        %v682 = vadd.f32 %v633, %v681
        %683 = vmatmul.bf16.gmra.mxu0 %v381
        %v684 = vpop.f32.mrf.mxu0
        %v685 = vadd.f32 %v636, %v684
        %v686 = vpop.f32.mrf.mxu0
        %v687 = vadd.f32 %v638, %v686
        %688 = vmatmul.bf16.gmra.mxu0 %v384
        %v689 = vpop.f32.mrf.mxu0
        %v690 = vadd.f32 %v641, %v689
        %v691 = vpop.f32.mrf.mxu0
        %v692 = vadd.f32 %v643, %v691
        %693 = vmatmul.bf16.gmra.mxu0 %v387
        %v694 = vpop.f32.mrf.mxu0
        %v695 = vadd.f32 %v646, %v694
        %v696 = vpop.f32.mrf.mxu0
        %v697 = vadd.f32 %v648, %v696
        %698 = vmatmul.bf16.gmra.mxu0 %v390
        %v699 = vpop.f32.mrf.mxu0
        %v700 = vadd.f32 %v651, %v699
        %v701 = vpop.f32.mrf.mxu0
        %v702 = vadd.f32 %v653, %v701
        %703 = vmatmul.bf16.gmra.mxu0 %v393
        %v704 = vpop.f32.mrf.mxu0
        %v705 = vadd.f32 %v656, %v704
        %v706 = vpop.f32.mrf.mxu0
        %v707 = vadd.f32 %v658, %v706
        %708 = vdwg.mxu0
        %709 = vst [vmem:[%s207] sm:$0xff] %v670
        %710 = vst [vmem:[%s207 + $0x8] sm:$0xff] %v672
        %711 = vst [vmem:[%s207 + $0x10] sm:$0xff] %v675
        %712 = vst [vmem:[%s207 + $0x18] sm:$0xff] %v677
        %713 = vst [vmem:[%s207 + $0x20] sm:$0xff] %v680
        %714 = vst [vmem:[%s207 + $0x28] sm:$0xff] %v682
        %715 = vst [vmem:[%s207 + $0x30] sm:$0xff] %v685
        %716 = vst [vmem:[%s207 + $0x38] sm:$0xff] %v687
        %717 = vst [vmem:[%s207 + $0x40] sm:$0xff] %v690
        %718 = vst [vmem:[%s207 + $0x48] sm:$0xff] %v692
        %719 = vst [vmem:[%s207 + $0x50] sm:$0xff] %v695
        %720 = vst [vmem:[%s207 + $0x58] sm:$0xff] %v697
        %721 = vst [vmem:[%s207 + $0x60] sm:$0xff] %v700
        %722 = vst [vmem:[%s207 + $0x68] sm:$0xff] %v702
        %723 = vst [vmem:[%s207 + $0x70] sm:$0xff] %v705
        %724 = vst [vmem:[%s207 + $0x78] sm:$0xff] %v707
        %s725 = sand.u32 %s98, 1
        %s726 = scalar_lea.sflag [#allocation5], %s725
        %s727 = sand.u32 %s98, 1
        %s728 = smul.addr %s727, 128
        %s729 = scalar_lea.vmem [#allocation8], %s728
        // Predicated region
        $region41: #{tpu_custom_call.1} parent=31 // pred_check
          %p730 = pneg %p108
        $region42: #{tpu_custom_call.1} parent=31 // pred_check_branch
          %732 = sbr.rel (%p730) target = $region44
        $region43: #{tpu_custom_call.1} parent=31 // pred_region
          %734 = vsyncadd %s726, 0
          %s735 = smul.addr %s22, 8
          %s736 = scalar_lea.hbm %s3, %s735
          %s737 = sshll.u32 %s729, 4
          %s738 = int_to_ptr.vmem [resolvable:$true] %s737
          %s739 = sshll.u32 %s736, 4
          %s740 = int_to_ptr.hbm [resolvable:$true] %s739
          %745 = dma.vmem_to_hbm [thread:$0]  %s738, 2048, %s740, %s726, 128, 256, 8
        $region44: #{tpu_custom_call.1} parent=31 // pred_fallthru
          _
      $region32: #{tpu_custom_call.1} parent=5 // pred_fallthru
        _
      %p746 = scmp.le.s32.totalorder 2, %s17
      // Predicated region
      $region45: #{tpu_custom_call.1} parent=5 // pred_check
        %p747 = pneg %p746
      $region46: #{tpu_custom_call.1} parent=5 // pred_check_branch
        %749 = sbr.rel (%p747) target = $region48
      $region47: #{tpu_custom_call.1} parent=5 // pred_region
        %s750 = ssub.s32 %s17, 2
        // Predicated region
        $region49: #{tpu_custom_call.1} parent=47 // pred_check
          %p751 = pneg %p114
        $region50: #{tpu_custom_call.1} parent=47 // pred_check_branch
          %753 = sbr.rel (%p751) target = $region52
        $region51: #{tpu_custom_call.1} parent=47 // pred_region
          %s754 = sand.u32 %s99, 1
          %s755 = scalar_lea.sflag [#allocation5], %s754
          %s756 = sand.u32 %s99, 1
          %s757 = smul.addr %s756, 128
          %s758 = scalar_lea.vmem [#allocation8], %s757
          %760 = dma.done %s755, 2048
        $region52: #{tpu_custom_call.1} parent=47 // pred_fallthru
          _
      $region48: #{tpu_custom_call.1} parent=5 // pred_fallthru
        _
    $region6: #{tpu_custom_call.1} parent=1 // loop_footer
      %s21 = sadd.s32 1, %s17
    $region7: #{tpu_custom_call.1} parent=1 // loop_footer_branch
      %16 = sbr.rel target = $region3
    $region8: #{tpu_custom_call.1} parent=1 // loop_exit
      _
    %761 = vsyncpa [#allocation4], 1
    %s762 = scalar_lea.sflag [#allocation4], 1
    %763 = vsyncpa %s762, 1
    %764 = vsyncpa [#allocation7], 1
    %s765 = scalar_lea.sflag [#allocation7], 1
    %766 = vsyncpa %s765, 1
    %767 = vsyncpa [#allocation5], 1
    %s768 = scalar_lea.sflag [#allocation5], 1
    %769 = vsyncpa %s768, 1

</llo_original>
